<compile_context>
chip_gen: v5e
topology: v5e:2x2
jax: 0.10.0
libtpu: 0.0.40
codegen_flags: <defaults>
</compile_context>

<pallas_src>
import functools
import math

import jax
import jax.numpy as jnp
from jax.experimental import pallas as pl
from jax.experimental.pallas import tpu as pltpu


def _cat_dma_kernel(col_offsets, *refs):
    """refs = (in_ref_0, ..., in_ref_{k-1}, out_ref, copy_sems).

    All refs live in HBM (memory_space=pl.ANY).  For input i we issue one
    async DMA from the whole 2-D input into the output's column slice
    [:, off_i : off_i + width_i].  The copies target disjoint regions of the
    output, so all are started concurrently and waited on at the end.
    """
    k = len(col_offsets)
    in_refs = refs[:k]
    out_ref = refs[k]
    sems = refs[k + 1]

    copies = []
    for i, (in_ref, off) in enumerate(zip(in_refs, col_offsets)):
        width = in_ref.shape[1]  # static python int
        cp = pltpu.make_async_copy(
            in_ref,
            out_ref.at[:, off:off + width],
            sems.at[i],
        )
        cp.start()
        copies.append(cp)

    for cp in copies:
        cp.wait()


def cat_pallas(xs, dim=1):
    """torch.cat(xs, dim) for a list of same-rank, same-dtype arrays."""
    xs = list(xs)
    assert len(xs) >= 1
    ndim = xs[0].ndim
    dim = dim % ndim
    dtype = xs[0].dtype
    lead = xs[0].shape[:dim]
    trail = xs[0].shape[dim + 1:]
    for x in xs:
        assert x.ndim == ndim and x.dtype == dtype
        assert x.shape[:dim] == lead and x.shape[dim + 1:] == trail

    out_cat = sum(x.shape[dim] for x in xs)
    out_shape = lead + (out_cat,) + trail

    # Drop zero-width inputs (they contribute nothing); keep torch semantics.
    xs = [x for x in xs if x.shape[dim] > 0]
    if len(xs) == 1 and xs[0].shape == out_shape:
        return xs[0]

    rows = math.prod(lead) if lead else 1
    tail = math.prod(trail) if trail else 1

    # Flattened column width and offset (in elements) of each input in the
    # 2-D (rows, total_cols) view of the output.
    widths = [x.shape[dim] * tail for x in xs]
    total_cols = sum(widths)
    offsets = []
    acc = 0
    for w in widths:
        offsets.append(acc)
        acc += w

    # Free, contiguous reshapes: (lead..., C_i, trail...) -> (rows, C_i*tail).
    xs2d = [x.reshape(rows, w) for x, w in zip(xs, widths)]

    kernel = functools.partial(_cat_dma_kernel, tuple(offsets))

    out2d = pl.pallas_call(
        kernel,
        out_shape=jax.ShapeDtypeStruct((rows, total_cols), dtype),
        # Everything stays in HBM; the kernel moves data with explicit DMAs.
        in_specs=[pl.BlockSpec(memory_space=pl.ANY) for _ in xs2d],
        out_specs=pl.BlockSpec(memory_space=pl.ANY),
        scratch_shapes=[pltpu.SemaphoreType.DMA((len(xs2d),))],
        compiler_params=pltpu.CompilerParams(has_side_effects=True),
    )(*xs2d)

    return out2d.reshape(out_shape)


if __name__ == "__main__":
    key = jax.random.PRNGKey(0)
    k1, k2, k3 = jax.random.split(key, 3)

    # Small NCHW inputs (batch=2, channels=4/4/2, spatial=16x16), cat dim=1.
    x1 = jax.random.normal(k1, (2, 4, 16, 16), dtype=jnp.float32)
    x2 = jax.random.normal(k2, (2, 4, 16, 16), dtype=jnp.float32)
    x3 = jax.random.normal(k3, (2, 2, 16, 16), dtype=jnp.float32)

    out = cat_pallas([x1, x2, x3], dim=1)
    out = jax.block_until_ready(out)

    ref = jnp.concatenate([x1, x2, x3], axis=1)
    assert out.shape == (2, 10, 16, 16), out.shape
    assert jnp.array_equal(out, ref), "mismatch vs jnp.concatenate reference"

    # Secondary check: bf16 inputs exercise the sub-32-bit DMA path.
    b1 = x1.astype(jnp.bfloat16)
    b2 = x2.astype(jnp.bfloat16)
    out_bf16 = jax.block_until_ready(cat_pallas([b1, b2], dim=1))
    ref_bf16 = jnp.concatenate([b1, b2], axis=1)
    assert jnp.array_equal(out_bf16, ref_bf16), "bf16 mismatch"

    print("KERNEL_OK")
</pallas_src>

<mosaic_0001>
module attributes {stable_mosaic.version = 11 : i64} {
  func.func @_cat_dma_kernel(%arg0: memref<2x1024xf32, #tpu.memory_space<any>>, %arg1: memref<2x1024xf32, #tpu.memory_space<any>>, %arg2: memref<2x512xf32, #tpu.memory_space<any>>, %arg3: memref<2x2560xf32, #tpu.memory_space<any>>, %arg4: memref<3x!tpu.dma_semaphore, #tpu.memory_space<semaphore_mem>>) attributes {dimension_semantics = [], scalar_prefetch = 0 : i64, scratch_operands = 1 : i64, tpu.core_type = #tpu.core_type<tc>} {
    %c0_i32 = arith.constant 0 : i32
    %c0_i32_0 = arith.constant 0 : i32
    %c0_i32_1 = arith.constant 0 : i32
    %0 = tpu.memref_slice %arg3[%c0_i32_0, %c0_i32_1] : memref<2x2560xf32, #tpu.memory_space<any>> -> memref<2x1024xf32, #tpu.memory_space<any>>
    %1 = tpu.memref_slice %arg4[%c0_i32] : memref<3x!tpu.dma_semaphore, #tpu.memory_space<semaphore_mem>> -> memref<1x!tpu.dma_semaphore, #tpu.memory_space<semaphore_mem>>
    %2 = tpu.memref_squeeze %1 : memref<1x!tpu.dma_semaphore, #tpu.memory_space<semaphore_mem>> -> memref<!tpu.dma_semaphore, #tpu.memory_space<semaphore_mem>>
    tpu.enqueue_dma source(%arg0 : memref<2x1024xf32, #tpu.memory_space<any>>) target(%0 : memref<2x1024xf32, #tpu.memory_space<any>>) target_semaphore(%2 : memref<!tpu.dma_semaphore, #tpu.memory_space<semaphore_mem>>)
    %c1_i32 = arith.constant 1 : i32
    %c0_i32_2 = arith.constant 0 : i32
    %c1024_i32 = arith.constant 1024 : i32
    %3 = tpu.memref_slice %arg3[%c0_i32_2, %c1024_i32] : memref<2x2560xf32, #tpu.memory_space<any>> -> memref<2x1024xf32, #tpu.memory_space<any>>
    %4 = tpu.memref_slice %arg4[%c1_i32] : memref<3x!tpu.dma_semaphore, #tpu.memory_space<semaphore_mem>> -> memref<1x!tpu.dma_semaphore, #tpu.memory_space<semaphore_mem>>
    %5 = tpu.memref_squeeze %4 : memref<1x!tpu.dma_semaphore, #tpu.memory_space<semaphore_mem>> -> memref<!tpu.dma_semaphore, #tpu.memory_space<semaphore_mem>>
    tpu.enqueue_dma source(%arg1 : memref<2x1024xf32, #tpu.memory_space<any>>) target(%3 : memref<2x1024xf32, #tpu.memory_space<any>>) target_semaphore(%5 : memref<!tpu.dma_semaphore, #tpu.memory_space<semaphore_mem>>)
    %c2_i32 = arith.constant 2 : i32
    %c0_i32_3 = arith.constant 0 : i32
    %c2048_i32 = arith.constant 2048 : i32
    %6 = tpu.memref_slice %arg3[%c0_i32_3, %c2048_i32] : memref<2x2560xf32, #tpu.memory_space<any>> -> memref<2x512xf32, #tpu.memory_space<any>>
    %7 = tpu.memref_slice %arg4[%c2_i32] : memref<3x!tpu.dma_semaphore, #tpu.memory_space<semaphore_mem>> -> memref<1x!tpu.dma_semaphore, #tpu.memory_space<semaphore_mem>>
    %8 = tpu.memref_squeeze %7 : memref<1x!tpu.dma_semaphore, #tpu.memory_space<semaphore_mem>> -> memref<!tpu.dma_semaphore, #tpu.memory_space<semaphore_mem>>
    tpu.enqueue_dma source(%arg2 : memref<2x512xf32, #tpu.memory_space<any>>) target(%6 : memref<2x512xf32, #tpu.memory_space<any>>) target_semaphore(%8 : memref<!tpu.dma_semaphore, #tpu.memory_space<semaphore_mem>>)
    %c0_i32_4 = arith.constant 0 : i32
    %c0_i32_5 = arith.constant 0 : i32
    %c0_i32_6 = arith.constant 0 : i32
    %9 = tpu.memref_slice %arg3[%c0_i32_5, %c0_i32_6] : memref<2x2560xf32, #tpu.memory_space<any>> -> memref<2x1024xf32, #tpu.memory_space<any>>
    %10 = tpu.memref_slice %arg4[%c0_i32_4] : memref<3x!tpu.dma_semaphore, #tpu.memory_space<semaphore_mem>> -> memref<1x!tpu.dma_semaphore, #tpu.memory_space<semaphore_mem>>
    %11 = tpu.memref_squeeze %10 : memref<1x!tpu.dma_semaphore, #tpu.memory_space<semaphore_mem>> -> memref<!tpu.dma_semaphore, #tpu.memory_space<semaphore_mem>>
    tpu.wait_dma2 semaphore(%11 : memref<!tpu.dma_semaphore, #tpu.memory_space<semaphore_mem>>) src(%arg0 : memref<2x1024xf32, #tpu.memory_space<any>>) dst(%9 : memref<2x1024xf32, #tpu.memory_space<any>>)
    %c1_i32_7 = arith.constant 1 : i32
    %c0_i32_8 = arith.constant 0 : i32
    %c1024_i32_9 = arith.constant 1024 : i32
    %12 = tpu.memref_slice %arg3[%c0_i32_8, %c1024_i32_9] : memref<2x2560xf32, #tpu.memory_space<any>> -> memref<2x1024xf32, #tpu.memory_space<any>>
    %13 = tpu.memref_slice %arg4[%c1_i32_7] : memref<3x!tpu.dma_semaphore, #tpu.memory_space<semaphore_mem>> -> memref<1x!tpu.dma_semaphore, #tpu.memory_space<semaphore_mem>>
    %14 = tpu.memref_squeeze %13 : memref<1x!tpu.dma_semaphore, #tpu.memory_space<semaphore_mem>> -> memref<!tpu.dma_semaphore, #tpu.memory_space<semaphore_mem>>
    tpu.wait_dma2 semaphore(%14 : memref<!tpu.dma_semaphore, #tpu.memory_space<semaphore_mem>>) src(%arg1 : memref<2x1024xf32, #tpu.memory_space<any>>) dst(%12 : memref<2x1024xf32, #tpu.memory_space<any>>)
    %c2_i32_10 = arith.constant 2 : i32
    %c0_i32_11 = arith.constant 0 : i32
    %c2048_i32_12 = arith.constant 2048 : i32
    %15 = tpu.memref_slice %arg3[%c0_i32_11, %c2048_i32_12] : memref<2x2560xf32, #tpu.memory_space<any>> -> memref<2x512xf32, #tpu.memory_space<any>>
    %16 = tpu.memref_slice %arg4[%c2_i32_10] : memref<3x!tpu.dma_semaphore, #tpu.memory_space<semaphore_mem>> -> memref<1x!tpu.dma_semaphore, #tpu.memory_space<semaphore_mem>>
    %17 = tpu.memref_squeeze %16 : memref<1x!tpu.dma_semaphore, #tpu.memory_space<semaphore_mem>> -> memref<!tpu.dma_semaphore, #tpu.memory_space<semaphore_mem>>
    tpu.wait_dma2 semaphore(%17 : memref<!tpu.dma_semaphore, #tpu.memory_space<semaphore_mem>>) src(%arg2 : memref<2x512xf32, #tpu.memory_space<any>>) dst(%15 : memref<2x512xf32, #tpu.memory_space<any>>)
    return
  }
}

</mosaic_0001>

<llo_original>
// kernel: tpu_custom_call.1
$region0: #{tpu_custom_call.1}
  #allocation0 [shape = 'u32[]', space=smem, size = 0x4, offset = 0x4, fixed_abs, tag = 'smem constant byte address 0x4 - core index']
  #allocation1 [shape = 'u32[72,128]{1,0:T(1,128)}', space=vmem, size = 0x9000, scoped, tag = 'internal scratch']
  #allocation2 [shape = 's32[3]{0}', space=sflag, size = 0xc, scoped, tag = 'scratch operand']
  #allocation3 [shape = 's32[]', space=sflag, size = 0x4, offset = 0, fixed_abs, tag = 'sflag constant byte address 0x0 - dummy sync flag']
  #allocation4 [shape = 'u32[0]{0}', space=smem, size = 0, offset = 0, fixed_abs, tag = 'smem constant byte address 0x0 - null']
  #allocation5 [shape = 's32[]', space=sflag, size = 0x4, offset = 0, fixed_abs, tag = 'sflag constant byte address 0x0 - dummy sync flag']
  #allocation6 [shape = 'u32[0]{0}', space=smem, size = 0, offset = 0, fixed_abs, tag = 'smem constant byte address 0x0 - null']
  #allocation7 [shape = 's32[]', space=sflag, size = 0x4, offset = 0, fixed_abs, tag = 'sflag constant byte address 0x0 - dummy sync flag']
  #allocation8 [shape = 'u32[0]{0}', space=smem, size = 0, offset = 0, fixed_abs, tag = 'smem constant byte address 0x0 - null']
  %s0 = inlined_call_operand.hbm [shape: f32[2,1024], index: 0, kind: input, shape index: {}]
  %s1 = inlined_call_operand.hbm [shape: f32[2,1024], index: 1, kind: input, shape index: {}]
  %s2 = inlined_call_operand.hbm [shape: f32[2,512], index: 2, kind: input, shape index: {}]
  %s3 = inlined_call_operand.hbm [shape: f32[2,2560], index: 3, kind: output, shape index: {}]
  %s4 = sld [smem:[#allocation0]]
  $region2: #{tpu_custom_call.1} parent=0
    _
  %s6 = ssub.s32 1, %s4
  %s7 = scalar_select 0, %s6, %s4
  %s9 = sshll.u32 1, 14
  %s10 = sxor.u32 4294967295, %s9
  %s12 = sshll.u32 %s0, 4
  %s13 = int_to_ptr.hbm [resolvable:$true] %s12
  %s14 = sshll.u32 %s3, 4
  %s15 = int_to_ptr.hbm [resolvable:$true] %s14
  %18 = dma.general %s13, 256, %s15, [#allocation2], [#allocation3], [#allocation4], 0, 0
  %s19 = scalar_lea.hbm %s3, 16
  %s20 = scalar_lea.sflag [#allocation2], 1
  %s22 = sshll.u32 1, 14
  %s23 = sxor.u32 4294967295, %s22
  %s25 = sshll.u32 %s1, 4
  %s26 = int_to_ptr.hbm [resolvable:$true] %s25
  %s27 = sshll.u32 %s19, 4
  %s28 = int_to_ptr.hbm [resolvable:$true] %s27
  %31 = dma.general %s26, 256, %s28, %s20, [#allocation5], [#allocation6], 0, 0
  %s32 = scalar_lea.hbm %s3, 32
  %s33 = scalar_lea.sflag [#allocation2], 2
  %s35 = sshll.u32 1, 14
  %s36 = sxor.u32 4294967295, %s35
  %s38 = sshll.u32 %s2, 4
  %s39 = int_to_ptr.hbm [resolvable:$true] %s38
  %s40 = sshll.u32 %s32, 4
  %s41 = int_to_ptr.hbm [resolvable:$true] %s40
  %44 = dma.general %s39, 128, %s41, %s33, [#allocation7], [#allocation8], 0, 0
  %s45 = smul.u32 2, 1
  %s46 = smul.u32 %s45, 8
  %s47 = sshll.u32 %s46, 4
  %48 = dma.done [#allocation2], %s47
  %s49 = sshll.u32 %s46, 4
  %50 = dma.done %s20, %s49
  %s51 = smul.u32 %s45, 4
  %s52 = sshll.u32 %s51, 4
  %53 = dma.done %s33, %s52
  %54 = vsyncmov [#allocation2]
  %s55 = vpop.sfrf %54
  %p56 = scmp.eq.s32.totalorder %s55, 0
  %p57 = pneg %p56
  %59 = shalt.err (%p57)
  %s60 = scalar_lea.sflag [#allocation2], 1
  %61 = vsyncmov %s60
  %s62 = vpop.sfrf %61
  %p63 = scmp.eq.s32.totalorder %s62, 0
  %p64 = pneg %p63
  %66 = shalt.err (%p64)
  %s67 = scalar_lea.sflag [#allocation2], 2
  %68 = vsyncmov %s67
  %s69 = vpop.sfrf %68
  %p70 = scmp.eq.s32.totalorder %s69, 0
  %p71 = pneg %p70
  %73 = shalt.err (%p71)

</llo_original>
